<compile_context>
chip_gen: v7x
topology: tpu7x:2x2x1
jax: 0.10.0
libtpu: 0.0.40
codegen_flags: <defaults>
</compile_context>

<pallas_src>
import jax
import jax.numpy as jnp
from jax.experimental import pallas as pl
from jax.experimental.pallas import tpu as pltpu


# ---------------------------------------------------------------------------
# Kernel
# ---------------------------------------------------------------------------
def net_kernel(x_ref, c1t_ref, vec1_ref, c2t_ref, vec2_ref, wt_ref, bias_ref,
               o_ref):
    """One batch tile. vecN_ref rows: [0] = -beta, [1] = -beta*||c||^2."""
    x = x_ref[...]                                                   # (TB, Din) f32

    # --- RBF layer 1 ---
    x_sq = jnp.sum(x * x, axis=-1, keepdims=True)                    # (TB, 1)  f32
    xc = jnp.dot(x.astype(c1t_ref.dtype), c1t_ref[...],              # MXU, bf16 ops
                 preferred_element_type=jnp.float32)                 # (TB, H1) f32
    nb1 = vec1_ref[0:1, :]                                           # (1, H1)
    cb1 = vec1_ref[1:2, :]                                           # (1, H1)
    # -beta*d2 = x@(2*beta*c.T) - beta*||c||^2 - beta*||x||^2 ; clamp at 0
    # (guards against cancellation in the matmul-identity distance).
    arg1 = jnp.minimum(xc + cb1 + x_sq * nb1, 0.0)
    h1 = jnp.exp(arg1)                                               # (TB, H1) f32, EUP

    # --- RBF layer 2 ---
    h1_sq = jnp.sum(h1 * h1, axis=-1, keepdims=True)                 # (TB, 1)  f32
    hc = jnp.dot(h1.astype(c2t_ref.dtype), c2t_ref[...],
                 preferred_element_type=jnp.float32)                 # (TB, H2) f32
    nb2 = vec2_ref[0:1, :]
    cb2 = vec2_ref[1:2, :]
    arg2 = jnp.minimum(hc + cb2 + h1_sq * nb2, 0.0)
    h2 = jnp.exp(arg2)                                               # (TB, H2) f32

    # --- Output linear (W pre-transposed to (H2, n_actions)) ---
    y = jnp.dot(h2.astype(wt_ref.dtype), wt_ref[...],
                preferred_element_type=jnp.float32)                  # (TB, A)  f32
    o_ref[...] = (y + bias_ref[...]).astype(o_ref.dtype)


# ---------------------------------------------------------------------------
# One-time parameter preprocessing (hoisted out of the per-call path)
# ---------------------------------------------------------------------------
def prepare_net_params(c1, beta1, c2, beta2, w, bias, *, mxu_dtype=jnp.bfloat16):
    """Pre-transpose / pre-scale parameters for the kernel.

    Shapes in: c1 (H1, Din), beta1 (1, H1), c2 (H2, H1), beta2 (1, H2),
               w (n_actions, H2), bias (1, n_actions) or (n_actions,).
    Returns a tuple passed straight to net_forward_prepared.
    """
    f32 = jnp.float32
    c1 = c1.astype(f32)
    c2 = c2.astype(f32)
    beta1 = beta1.astype(f32).reshape(1, -1)                         # (1, H1)
    beta2 = beta2.astype(f32).reshape(1, -1)                         # (1, H2)

    # Column-scaled, transposed centers for the MXU (2*beta folded in).
    c1t_s = (c1.T * (2.0 * beta1)).astype(mxu_dtype)                 # (Din, H1)
    c2t_s = (c2.T * (2.0 * beta2)).astype(mxu_dtype)                 # (H1, H2)

    # Packed per-layer constants: row 0 = -beta, row 1 = -beta*||c||^2.
    vec1 = jnp.concatenate(
        [-beta1, -beta1 * jnp.sum(c1 * c1, axis=-1)[None, :]], axis=0)   # (2, H1)
    vec2 = jnp.concatenate(
        [-beta2, -beta2 * jnp.sum(c2 * c2, axis=-1)[None, :]], axis=0)   # (2, H2)

    wt = w.astype(f32).T.astype(mxu_dtype)                           # (H2, n_actions)
    b = bias.astype(f32).reshape(1, -1)                              # (1, n_actions)
    return (c1t_s, vec1, c2t_s, vec2, wt, b)


# ---------------------------------------------------------------------------
# Forward pass
# ---------------------------------------------------------------------------
def net_forward_prepared(x, params, *, block_b=None):
    """x (B, Din) + prepared params -> (B, n_actions) float32."""
    c1t_s, vec1, c2t_s, vec2, wt, bias = params
    B, state_dim = x.shape
    n_actions = wt.shape[1]
    f32 = jnp.float32

    # Batch tile: sublane-aligned, large cap to amortize per-step overhead.
    # Per-tile VMEM is tiny even at TB=2048 (x tile 128 KiB, out tile 32 KiB,
    # double-buffered) -> fits the 32 MiB default scoped limit and v7x's 64 MiB.
    if block_b is None:
        block_b = min(max(B, 8), 2048)
        # v7x megacore: with large batches keep >= 4 grid steps so the
        # "parallel" batch axis shards across both TensorCores (no-op on 1-TC
        # v5e/v6e beyond a few extra ~0.35us steps).
        if B >= 1024:
            block_b = min(block_b, pl.cdiv(B, 4))
    block_b = max(8, (block_b // 8) * 8)
    grid = (pl.cdiv(B, block_b),)   # ragged last block handled by Pallas

    x_p = x.astype(f32)

    def full_spec(shape):
        return pl.BlockSpec(shape, lambda i: (0,) * len(shape))

    out = pl.pallas_call(
        net_kernel,
        grid=grid,
        out_shape=jax.ShapeDtypeStruct((B, n_actions), f32),
        in_specs=[
            pl.BlockSpec((block_b, state_dim), lambda i: (i, 0)),   # x: batch-tiled
            full_spec(c1t_s.shape),    # parameters: full blocks, VMEM-resident
            full_spec(vec1.shape),
            full_spec(c2t_s.shape),
            full_spec(vec2.shape),
            full_spec(wt.shape),
            full_spec(bias.shape),
        ],
        out_specs=pl.BlockSpec((block_b, n_actions), lambda i: (i, 0)),
        compiler_params=pltpu.CompilerParams(
            dimension_semantics=("parallel",)),
    )(x_p, c1t_s, vec1, c2t_s, vec2, wt, bias)

    return out


def net_forward(x, c1, beta1, c2, beta2, w, bias, *, block_b=None,
                mxu_dtype=jnp.bfloat16):
    """Convenience wrapper: prep params (ideally cache this) + run kernel."""
    params = prepare_net_params(c1, beta1, c2, beta2, w, bias, mxu_dtype=mxu_dtype)
    return net_forward_prepared(x, params, block_b=block_b)


# ---------------------------------------------------------------------------
# Pure-JAX reference (mirrors the PyTorch broadcast-subtract forward)
# ---------------------------------------------------------------------------
def net_forward_ref(x, c1, beta1, c2, beta2, w, bias):
    def rbf(x, centers, betas):
        diff = x[:, None, :] - centers[None, :, :]
        d2 = jnp.sum(diff * diff, axis=-1)
        return jnp.exp(-betas * d2)
    h1 = rbf(x, c1, beta1)
    h2 = rbf(h1, c2, beta2)
    return h2 @ w.T + bias


if __name__ == "__main__":
    # Small shapes consistent with the module: Net(state_dim=16, n_actions=4,
    # layers=[32, 32]) on a batch of 8.
    B, state_dim, H1, H2, n_actions = 8, 16, 32, 32, 4

    key = jax.random.PRNGKey(0)
    kx, kc1, kb1, kc2, kb2, kw, kb = jax.random.split(key, 7)

    x = jax.random.normal(kx, (B, state_dim), dtype=jnp.float32)

    # Deterministic synthetic parameters (the torch module never initializes
    # these tensors itself; we just fill them deterministically).
    c1 = jax.random.normal(kc1, (H1, state_dim), dtype=jnp.float32)
    beta1 = jax.random.uniform(kb1, (1, H1), dtype=jnp.float32, minval=0.1, maxval=1.0)
    c2 = jax.random.normal(kc2, (H2, H1), dtype=jnp.float32)
    beta2 = jax.random.uniform(kb2, (1, H2), dtype=jnp.float32, minval=0.1, maxval=1.0)
    w = jax.random.normal(kw, (n_actions, H2), dtype=jnp.float32) * 0.1
    bias = jax.random.normal(kb, (1, n_actions), dtype=jnp.float32) * 0.1

    ref = net_forward_ref(x, c1, beta1, c2, beta2, w, bias)

    # 1) f32 MXU path: tight agreement with the f32 reference.
    params_f32 = prepare_net_params(c1, beta1, c2, beta2, w, bias,
                                    mxu_dtype=jnp.float32)
    out_f32 = jax.block_until_ready(net_forward_prepared(x, params_f32))
    assert out_f32.shape == (B, n_actions)
    assert jnp.allclose(out_f32, ref, atol=1e-4, rtol=1e-4), \
        "f32-MXU kernel mismatch vs JAX reference"

    # 2) bf16 MXU path (default, the fast path): loose tolerance — bf16 operand
    #    precision, f32 accumulation / exp.
    params_bf16 = prepare_net_params(c1, beta1, c2, beta2, w, bias,
                                     mxu_dtype=jnp.bfloat16)
    out_bf16 = jax.block_until_ready(net_forward_prepared(x, params_bf16))
    assert out_bf16.shape == (B, n_actions)
    assert jnp.allclose(out_bf16, ref, atol=5e-2, rtol=5e-2), \
        "bf16-MXU kernel mismatch vs JAX reference"

    print("KERNEL_OK")
</pallas_src>

<mosaic_0001>
module attributes {stable_mosaic.version = 11 : i64} {
  func.func @net_kernel(%arg0: i32, %arg1: memref<8x16xf32, #tpu.memory_space<vmem>>, %arg2: memref<16x32xf32, #tpu.memory_space<vmem>>, %arg3: memref<2x32xf32, #tpu.memory_space<vmem>>, %arg4: memref<32x32xf32, #tpu.memory_space<vmem>>, %arg5: memref<2x32xf32, #tpu.memory_space<vmem>>, %arg6: memref<32x4xf32, #tpu.memory_space<vmem>>, %arg7: memref<1x4xf32, #tpu.memory_space<vmem>>, %arg8: memref<8x4xf32, #tpu.memory_space<vmem>>) attributes {dimension_semantics = [#tpu.dimension_semantics<parallel>], iteration_bounds = array<i64: 1>, scalar_prefetch = 0 : i64, scratch_operands = 0 : i64, tpu.core_type = #tpu.core_type<tc>, window_params = [{transform_indices = @transform_0, window_bounds = array<i64: 8, 16>}, {pipeline_mode = #tpu.pipeline_mode<synchronous>, transform_indices = @transform_1, window_bounds = array<i64: 16, 32>}, {pipeline_mode = #tpu.pipeline_mode<synchronous>, transform_indices = @transform_2, window_bounds = array<i64: 2, 32>}, {pipeline_mode = #tpu.pipeline_mode<synchronous>, transform_indices = @transform_3, window_bounds = array<i64: 32, 32>}, {pipeline_mode = #tpu.pipeline_mode<synchronous>, transform_indices = @transform_4, window_bounds = array<i64: 2, 32>}, {pipeline_mode = #tpu.pipeline_mode<synchronous>, transform_indices = @transform_5, window_bounds = array<i64: 32, 4>}, {pipeline_mode = #tpu.pipeline_mode<synchronous>, transform_indices = @transform_6, window_bounds = array<i64: 1, 4>}, {transform_indices = @transform_7, window_bounds = array<i64: 8, 4>}]} {
    %c0 = arith.constant 0 : index
    %c0_0 = arith.constant 0 : index
    %0 = vector.load %arg1[%c0, %c0_0] : memref<8x16xf32, #tpu.memory_space<vmem>>, vector<8x16xf32>
    %1 = arith.mulf %0, %0 : vector<8x16xf32>
    %cst = arith.constant dense<0.000000e+00> : vector<8xf32>
    %2 = vector.multi_reduction <add>, %1, %cst [1] : vector<8x16xf32> to vector<8xf32>
    %3 = vector.shape_cast %2 : vector<8xf32> to vector<8x1xf32>
    %c0_1 = arith.constant 0 : index
    %c0_2 = arith.constant 0 : index
    %4 = vector.load %arg2[%c0_1, %c0_2] : memref<16x32xf32, #tpu.memory_space<vmem>>, vector<16x32xf32>
    %cst_3 = arith.constant dense<0.000000e+00> : vector<8x32xf32>
    %5 = tpu.matmul %0, %4, %cst_3 {dimension_numbers = #tpu.dot_dimension_numbers<[1], [0], [0], [1], [0, 0, 1, 1], [], []>} : vector<8x16xf32>, vector<16x32xf32>, vector<8x32xf32> -> vector<8x32xf32>
    %c0_4 = arith.constant 0 : index
    %c0_5 = arith.constant 0 : index
    %6 = vector.load %arg3[%c0_4, %c0_5] : memref<2x32xf32, #tpu.memory_space<vmem>>, vector<1x32xf32>
    %c1 = arith.constant 1 : index
    %c0_6 = arith.constant 0 : index
    %7 = vector.load %arg3[%c1, %c0_6] : memref<2x32xf32, #tpu.memory_space<vmem>>, vector<1x32xf32>
    %8 = vector.broadcast %7 : vector<1x32xf32> to vector<8x32xf32>
    %9 = arith.addf %5, %8 : vector<8x32xf32>
    %10 = vector.broadcast %3 : vector<8x1xf32> to vector<8x32xf32>
    %11 = vector.broadcast %6 : vector<1x32xf32> to vector<8x32xf32>
    %12 = arith.mulf %10, %11 : vector<8x32xf32>
    %13 = arith.addf %9, %12 : vector<8x32xf32>
    %cst_7 = arith.constant 0.000000e+00 : f32
    %14 = vector.broadcast %cst_7 : f32 to vector<8x32xf32>
    %15 = arith.minimumf %13, %14 : vector<8x32xf32>
    %16 = math.exp %15 : vector<8x32xf32>
    %17 = arith.mulf %16, %16 : vector<8x32xf32>
    %cst_8 = arith.constant dense<0.000000e+00> : vector<8xf32>
    %18 = vector.multi_reduction <add>, %17, %cst_8 [1] : vector<8x32xf32> to vector<8xf32>
    %19 = vector.shape_cast %18 : vector<8xf32> to vector<8x1xf32>
    %c0_9 = arith.constant 0 : index
    %c0_10 = arith.constant 0 : index
    %20 = vector.load %arg4[%c0_9, %c0_10] : memref<32x32xf32, #tpu.memory_space<vmem>>, vector<32x32xf32>
    %cst_11 = arith.constant dense<0.000000e+00> : vector<8x32xf32>
    %21 = tpu.matmul %16, %20, %cst_11 {dimension_numbers = #tpu.dot_dimension_numbers<[1], [0], [0], [1], [0, 0, 1, 1], [], []>} : vector<8x32xf32>, vector<32x32xf32>, vector<8x32xf32> -> vector<8x32xf32>
    %c0_12 = arith.constant 0 : index
    %c0_13 = arith.constant 0 : index
    %22 = vector.load %arg5[%c0_12, %c0_13] : memref<2x32xf32, #tpu.memory_space<vmem>>, vector<1x32xf32>
    %c1_14 = arith.constant 1 : index
    %c0_15 = arith.constant 0 : index
    %23 = vector.load %arg5[%c1_14, %c0_15] : memref<2x32xf32, #tpu.memory_space<vmem>>, vector<1x32xf32>
    %24 = vector.broadcast %23 : vector<1x32xf32> to vector<8x32xf32>
    %25 = arith.addf %21, %24 : vector<8x32xf32>
    %26 = vector.broadcast %19 : vector<8x1xf32> to vector<8x32xf32>
    %27 = vector.broadcast %22 : vector<1x32xf32> to vector<8x32xf32>
    %28 = arith.mulf %26, %27 : vector<8x32xf32>
    %29 = arith.addf %25, %28 : vector<8x32xf32>
    %cst_16 = arith.constant 0.000000e+00 : f32
    %30 = vector.broadcast %cst_16 : f32 to vector<8x32xf32>
    %31 = arith.minimumf %29, %30 : vector<8x32xf32>
    %32 = math.exp %31 : vector<8x32xf32>
    %c0_17 = arith.constant 0 : index
    %c0_18 = arith.constant 0 : index
    %33 = vector.load %arg6[%c0_17, %c0_18] : memref<32x4xf32, #tpu.memory_space<vmem>>, vector<32x4xf32>
    %cst_19 = arith.constant dense<0.000000e+00> : vector<8x4xf32>
    %34 = tpu.matmul %32, %33, %cst_19 {dimension_numbers = #tpu.dot_dimension_numbers<[1], [0], [0], [1], [0, 0, 1, 1], [], []>} : vector<8x32xf32>, vector<32x4xf32>, vector<8x4xf32> -> vector<8x4xf32>
    %c0_20 = arith.constant 0 : index
    %c0_21 = arith.constant 0 : index
    %35 = vector.load %arg7[%c0_20, %c0_21] : memref<1x4xf32, #tpu.memory_space<vmem>>, vector<1x4xf32>
    %36 = vector.broadcast %35 : vector<1x4xf32> to vector<8x4xf32>
    %37 = arith.addf %34, %36 : vector<8x4xf32>
    %c0_22 = arith.constant 0 : index
    %c0_23 = arith.constant 0 : index
    %38 = vector.load %arg8[%c0_22, %c0_23] : memref<8x4xf32, #tpu.memory_space<vmem>>, vector<8x4xf32>
    tpu.vector_store %arg8[%c0_22, %c0_23], %37 {strides = array<i32>} : memref<8x4xf32, #tpu.memory_space<vmem>>, vector<8x4xf32>,
    return
  }
  func.func @transform_0(%arg0: i32) -> (i32, i32) {
    %c0_i32 = arith.constant 0 : i32
    %c0_i32_0 = arith.constant 0 : i32
    return %arg0, %c0_i32 : i32, i32
  }
  func.func @transform_1(%arg0: i32) -> (i32, i32) {
    %c0_i32 = arith.constant 0 : i32
    %c0_i32_0 = arith.constant 0 : i32
    %c0_i32_1 = arith.constant 0 : i32
    return %c0_i32, %c0_i32_0 : i32, i32
  }
  func.func @transform_2(%arg0: i32) -> (i32, i32) {
    %c0_i32 = arith.constant 0 : i32
    %c0_i32_0 = arith.constant 0 : i32
    %c0_i32_1 = arith.constant 0 : i32
    return %c0_i32, %c0_i32_0 : i32, i32
  }
  func.func @transform_3(%arg0: i32) -> (i32, i32) {
    %c0_i32 = arith.constant 0 : i32
    %c0_i32_0 = arith.constant 0 : i32
    %c0_i32_1 = arith.constant 0 : i32
    return %c0_i32, %c0_i32_0 : i32, i32
  }
  func.func @transform_4(%arg0: i32) -> (i32, i32) {
    %c0_i32 = arith.constant 0 : i32
    %c0_i32_0 = arith.constant 0 : i32
    %c0_i32_1 = arith.constant 0 : i32
    return %c0_i32, %c0_i32_0 : i32, i32
  }
  func.func @transform_5(%arg0: i32) -> (i32, i32) {
    %c0_i32 = arith.constant 0 : i32
    %c0_i32_0 = arith.constant 0 : i32
    %c0_i32_1 = arith.constant 0 : i32
    return %c0_i32, %c0_i32_0 : i32, i32
  }
  func.func @transform_6(%arg0: i32) -> (i32, i32) {
    %c0_i32 = arith.constant 0 : i32
    %c0_i32_0 = arith.constant 0 : i32
    %c0_i32_1 = arith.constant 0 : i32
    return %c0_i32, %c0_i32_0 : i32, i32
  }
  func.func @transform_7(%arg0: i32) -> (i32, i32) {
    %c0_i32 = arith.constant 0 : i32
    %c0_i32_0 = arith.constant 0 : i32
    return %arg0, %c0_i32 : i32, i32
  }
}

</mosaic_0001>

<llo_original>
// kernel: tpu_custom_call.1
$region0: #{tpu_custom_call.1}
  #allocation0 [shape = 'u32[]', space=smem, size = 0x4, offset = 0x4, fixed_abs, tag = 'smem constant byte address 0x4 - core index']
  #allocation1 [shape = 'u32[144,128]{1,0:T(1,128)}', space=vmem, size = 0x12000, scoped, tag = 'internal scratch']
  %s0 = inlined_call_operand.vmem [shape: f32[8,16], index: 0, kind: input, shape index: {}]
  %s1 = inlined_call_operand.hbm [shape: f32[16,32], index: 1, kind: input, shape index: {}]
  %s2 = inlined_call_operand.vmem [shape: f32[2,32], index: 2, kind: input, shape index: {}]
  %s3 = inlined_call_operand.vmem [shape: f32[32,32], index: 3, kind: input, shape index: {}]
  %s4 = inlined_call_operand.vmem [shape: f32[2,32], index: 4, kind: input, shape index: {}]
  %s5 = inlined_call_operand.vmem [shape: f32[32,4], index: 5, kind: input, shape index: {}]
  %s6 = inlined_call_operand.vmem [shape: f32[1,4], index: 6, kind: input, shape index: {}]
  %s7 = inlined_call_operand.vmem [shape: f32[8,4], index: 7, kind: output, shape index: {}]
  %s8 = sld [smem:[#allocation0]]
  $region42: #{tpu_custom_call.1} parent=0
    _
  %s10 = ssub.s32 1, %s8
  %s11 = scalar_select 0, %s10, %s8
  $region1: #{tpu_custom_call.1} parent=0
    #allocation2 [shape = 'u8[8192]{0}', space=vmem, size = 0x2000, scoped, tag = 'input window, operand 1, single buffered']
    #allocation3 [shape = 's32[1]{0}', space=sflag, size = 0x4, scoped, tag = 'scoped memory for tpu_custom_call.1']
    %12 = vsyncpa [#allocation3], 0
    // Predicated region
    $region2: #{tpu_custom_call.1} parent=1 // pred_check
      _
    $region3: #{tpu_custom_call.1} parent=1 // pred_check_branch
      %14 = sbr.rel (0) target = $region5
    $region4: #{tpu_custom_call.1} parent=1 // pred_region
      _
    $region5: #{tpu_custom_call.1} parent=1 // pred_fallthru
      _
    // Predicated region
    $region6: #{tpu_custom_call.1} parent=1 // pred_check
      _
    $region7: #{tpu_custom_call.1} parent=1 // pred_check_branch
      %16 = sbr.rel (0) target = $region9
    $region8: #{tpu_custom_call.1} parent=1 // pred_region
      %s18 = ssub.s32 256, 256
      %19 = vsyncadd [#allocation3], %s18
      %s20 = sshll.u32 [#allocation2], 4
      %s21 = int_to_ptr.vmem [resolvable:$true] %s20
      %26 = dma.hbm_to_vmem [thread:$0]  %s1, 256, %s21, [#allocation3], 128, 128, 8
    $region9: #{tpu_custom_call.1} parent=1 // pred_fallthru
      _
    // Predicated region
    $region10: #{tpu_custom_call.1} parent=1 // pred_check
      _
    $region11: #{tpu_custom_call.1} parent=1 // pred_check_branch
      %28 = sbr.rel (0) target = $region13
    $region12: #{tpu_custom_call.1} parent=1 // pred_region
      _
    $region13: #{tpu_custom_call.1} parent=1 // pred_fallthru
      _
    // Predicated region
    $region14: #{tpu_custom_call.1} parent=1 // pred_check
      _
    $region15: #{tpu_custom_call.1} parent=1 // pred_check_branch
      %30 = sbr.rel (0) target = $region17
    $region16: #{tpu_custom_call.1} parent=1 // pred_region
      _
    $region17: #{tpu_custom_call.1} parent=1 // pred_fallthru
      _
    // Predicated region
    $region18: #{tpu_custom_call.1} parent=1 // pred_check
      _
    $region19: #{tpu_custom_call.1} parent=1 // pred_check_branch
      %32 = sbr.rel (0) target = $region21
    $region20: #{tpu_custom_call.1} parent=1 // pred_region
      _
    $region21: #{tpu_custom_call.1} parent=1 // pred_fallthru
      _
    // Predicated region
    $region22: #{tpu_custom_call.1} parent=1 // pred_check
      _
    $region23: #{tpu_custom_call.1} parent=1 // pred_check_branch
      %34 = sbr.rel (0) target = $region25
    $region24: #{tpu_custom_call.1} parent=1 // pred_region
      _
    $region25: #{tpu_custom_call.1} parent=1 // pred_fallthru
      _
    // Predicated region
    $region26: #{tpu_custom_call.1} parent=1 // pred_check
      _
    $region27: #{tpu_custom_call.1} parent=1 // pred_check_branch
      %36 = sbr.rel (0) target = $region29
    $region28: #{tpu_custom_call.1} parent=1 // pred_region
      _
    $region29: #{tpu_custom_call.1} parent=1 // pred_fallthru
      _
    // Predicated region
    $region30: #{tpu_custom_call.1} parent=1 // pred_check
      _
    $region31: #{tpu_custom_call.1} parent=1 // pred_check_branch
      %38 = sbr.rel (0) target = $region33
    $region32: #{tpu_custom_call.1} parent=1 // pred_region
      %39 = dma.done [#allocation3], 256
    $region33: #{tpu_custom_call.1} parent=1 // pred_fallthru
      _
    %v40 = vld [vmem:[%s0] sm:$0xff]
    %v41 = vmul.f32 %v40, %v40
    %vm42 = vcmask 130048
    %v43 = vsel %vm42, %v41, 0.0
    %44 = vadd.xlane.f32.xlu0 %v43
    %v45 = vpop.xlane.xlu0 %44
    %v46 = vld [vmem:[#allocation2] sm:$0xff]
    %v47 = vld [vmem:[#allocation2 + $0x8] sm:$0xff]
    %v48 = vld [vmem:[%s2] sm:$0x1]
    %v49 = vld [vmem:[%s2 + $0x1] sm:$0x1]
    %v50 = vlaneseq
    %v51 = vshrl.u32 %v50, 7
    %v52 = vsub.s32 0, %v51
    %v53 = vrot.slane %v49, %v52
    %v55 = vsel %vm42, %v40, 0
    %57 = vmatprep.subr.mxu0 0.0
    %58 = vmatpush1.msra.mxu0 %v46
    %59 = vmatprep.subr.mxu0 0.0
    %60 = vmatpush1.msra.mxu0 %v47
    %61 = vmatprep.subr.mxu0 0.0
    %62 = vmatpush1.msra.mxu0 0.0
    %63 = vmatprep.subr.mxu0 0.0
    %64 = vmatpush1.msra.mxu0 0.0
    %65 = vmatprep.subr.mxu0 0.0
    %66 = vmatpush1.msra.mxu0 0.0
    %67 = vmatprep.subr.mxu0 0.0
    %68 = vmatpush1.msra.mxu0 0.0
    %69 = vmatprep.subr.mxu0 0.0
    %70 = vmatpush1.msra.mxu0 0.0
    %71 = vmatprep.subr.mxu0 0.0
    %72 = vmatpush1.msra.mxu0 0.0
    %73 = vmatprep.subr.mxu0 0.0
    %74 = vmatpush1.msra.mxu0 0.0
    %75 = vmatprep.subr.mxu0 0.0
    %76 = vmatpush1.msra.mxu0 0.0
    %77 = vmatprep.subr.mxu0 0.0
    %78 = vmatpush1.msra.mxu0 0.0
    %79 = vmatprep.subr.mxu0 0.0
    %80 = vmatpush1.msra.mxu0 0.0
    %81 = vmatprep.subr.mxu0 0.0
    %82 = vmatpush1.msra.mxu0 0.0
    %83 = vmatprep.subr.mxu0 0.0
    %84 = vmatpush1.msra.mxu0 0.0
    %85 = vmatprep.subr.mxu0 0.0
    %86 = vmatpush1.msra.mxu0 0.0
    %87 = vmatprep.subr.mxu0 0.0
    %88 = vmatpush1.msra.mxu0 0.0
    %89 = vmatprep.subr.mxu0 0.0
    %90 = vmatpush1.msra.mxu0 0.0
    %91 = vmatprep.subr.mxu0 0.0
    %92 = vmatpush1.msra.mxu0 0.0
    %93 = vmatprep.subr.mxu0 0.0
    %94 = vmatpush1.msra.mxu0 0.0
    %95 = vmatprep.subr.mxu0 0.0
    %96 = vmatpush1.msra.mxu0 0.0
    %97 = vmatprep.subr.mxu0 0.0
    %98 = vmatpush1.msra.mxu0 0.0
    %99 = vmatprep.subr.mxu0 0.0
    %100 = vmatpush1.msra.mxu0 0.0
    %101 = vmatprep.subr.mxu0 0.0
    %102 = vmatpush1.msra.mxu0 0.0
    %103 = vmatprep.subr.mxu0 0.0
    %104 = vmatpush1.msra.mxu0 0.0
    %105 = vmatprep.subr.mxu0 0.0
    %106 = vmatpush1.msra.mxu0 0.0
    %107 = vmatprep.subr.mxu0 0.0
    %108 = vmatpush1.msra.mxu0 0.0
    %109 = vmatprep.subr.mxu0 0.0
    %110 = vmatpush1.msra.mxu0 0.0
    %111 = vmatprep.subr.mxu0 0.0
    %112 = vmatpush1.msra.mxu0 0.0
    %113 = vmatprep.subr.mxu0 0.0
    %114 = vmatpush1.msra.mxu0 0.0
    %115 = vmatprep.subr.mxu0 0.0
    %116 = vmatpush1.msra.mxu0 0.0
    %117 = vmatprep.subr.mxu0 0.0
    %118 = vmatpush1.msra.mxu0 0.0
    %119 = vmatprep.subr.mxu0 0.0
    %120 = vmatpush1.msra.mxu0 0.0
    %121 = vmatprep.mubr.f32.mxu0 0.0
    %122 = vmatmul.mubr.f32.gmra.mrb[0].mxu0 %v55
    %v123 = vpop.f32.mrb[0].mxu0
    %v124 = vadd.f32 %v53, %v123
    %v125 = vpop.f32.mrb[0].mxu0
    %126 = vdwg.mxu0
    %v127 = vlaneseq
    %v128 = vshrl.u32 %v127, 7
    %v129 = vsub.s32 0, %v128
    %v130 = vrot.slane %v48, %v129
    %v131 = vmul.f32 %v45, %v130
    %v132 = vadd.f32 %v124, %v131
    %v133 = vmin.f32 %v132, 0.0
    %v134 = vmul.f32 %v133, 1.442695
    %v135 = vpow.pop %v134
    %v136 = vmul.f32 %v135, %v135
    %vm137 = vcmask 261120
    %v138 = vsel %vm137, %v136, 0.0
    %139 = vadd.xlane.f32.xlu0 %v138
    %v140 = vpop.xlane.xlu0 %139
    %v141 = vld [vmem:[%s3] sm:$0xff]
    %v142 = vld [vmem:[%s3 + $0x8] sm:$0xff]
    %v143 = vld [vmem:[%s3 + $0x10] sm:$0xff]
    %v144 = vld [vmem:[%s3 + $0x18] sm:$0xff]
    %v145 = vld [vmem:[%s4] sm:$0x1]
    %v146 = vld [vmem:[%s4 + $0x1] sm:$0x1]
    %v147 = vlaneseq
    %v148 = vshrl.u32 %v147, 7
    %v149 = vsub.s32 0, %v148
    %v150 = vrot.slane %v146, %v149
    %v152 = vsel %vm137, %v135, 0
    %154 = vmatprep.subr.mxu0 0.0
    %155 = vmatpush1.msra.mxu0 %v141
    %156 = vmatprep.subr.mxu0 0.0
    %157 = vmatpush1.msra.mxu0 %v142
    %158 = vmatprep.subr.mxu0 0.0
    %159 = vmatpush1.msra.mxu0 %v143
    %160 = vmatprep.subr.mxu0 0.0
    %161 = vmatpush1.msra.mxu0 %v144
    %162 = vmatprep.subr.mxu0 0.0
    %163 = vmatpush1.msra.mxu0 0.0
    %164 = vmatprep.subr.mxu0 0.0
    %165 = vmatpush1.msra.mxu0 0.0
    %166 = vmatprep.subr.mxu0 0.0
    %167 = vmatpush1.msra.mxu0 0.0
    %168 = vmatprep.subr.mxu0 0.0
    %169 = vmatpush1.msra.mxu0 0.0
    %170 = vmatprep.subr.mxu0 0.0
    %171 = vmatpush1.msra.mxu0 0.0
    %172 = vmatprep.subr.mxu0 0.0
    %173 = vmatpush1.msra.mxu0 0.0
    %174 = vmatprep.subr.mxu0 0.0
    %175 = vmatpush1.msra.mxu0 0.0
    %176 = vmatprep.subr.mxu0 0.0
    %177 = vmatpush1.msra.mxu0 0.0
    %178 = vmatprep.subr.mxu0 0.0
    %179 = vmatpush1.msra.mxu0 0.0
    %180 = vmatprep.subr.mxu0 0.0
    %181 = vmatpush1.msra.mxu0 0.0
    %182 = vmatprep.subr.mxu0 0.0
    %183 = vmatpush1.msra.mxu0 0.0
    %184 = vmatprep.subr.mxu0 0.0
    %185 = vmatpush1.msra.mxu0 0.0
    %186 = vmatprep.subr.mxu0 0.0
    %187 = vmatpush1.msra.mxu0 0.0
    %188 = vmatprep.subr.mxu0 0.0
    %189 = vmatpush1.msra.mxu0 0.0
    %190 = vmatprep.subr.mxu0 0.0
    %191 = vmatpush1.msra.mxu0 0.0
    %192 = vmatprep.subr.mxu0 0.0
    %193 = vmatpush1.msra.mxu0 0.0
    %194 = vmatprep.subr.mxu0 0.0
    %195 = vmatpush1.msra.mxu0 0.0
    %196 = vmatprep.subr.mxu0 0.0
    %197 = vmatpush1.msra.mxu0 0.0
    %198 = vmatprep.subr.mxu0 0.0
    %199 = vmatpush1.msra.mxu0 0.0
    %200 = vmatprep.subr.mxu0 0.0
    %201 = vmatpush1.msra.mxu0 0.0
    %202 = vmatprep.subr.mxu0 0.0
    %203 = vmatpush1.msra.mxu0 0.0
    %204 = vmatprep.subr.mxu0 0.0
    %205 = vmatpush1.msra.mxu0 0.0
    %206 = vmatprep.subr.mxu0 0.0
    %207 = vmatpush1.msra.mxu0 0.0
    %208 = vmatprep.subr.mxu0 0.0
    %209 = vmatpush1.msra.mxu0 0.0
    %210 = vmatprep.subr.mxu0 0.0
    %211 = vmatpush1.msra.mxu0 0.0
    %212 = vmatprep.subr.mxu0 0.0
    %213 = vmatpush1.msra.mxu0 0.0
    %214 = vmatprep.subr.mxu0 0.0
    %215 = vmatpush1.msra.mxu0 0.0
    %216 = vmatprep.subr.mxu0 0.0
    %217 = vmatpush1.msra.mxu0 0.0
    %218 = vmatprep.mubr.f32.mxu0 0.0
    %219 = vmatmul.mubr.f32.gmra.mrb[0].mxu0 %v152
    %v220 = vpop.f32.mrb[0].mxu0
    %v221 = vadd.f32 %v150, %v220
    %v222 = vpop.f32.mrb[0].mxu0
    %223 = vdwg.mxu0
    %v224 = vlaneseq
    %v225 = vshrl.u32 %v224, 7
    %v226 = vsub.s32 0, %v225
    %v227 = vrot.slane %v145, %v226
    %v228 = vmul.f32 %v140, %v227
    %v229 = vadd.f32 %v221, %v228
    %v230 = vmin.f32 %v229, 0.0
    %v231 = vmul.f32 %v230, 1.442695
    %v232 = vpow.pop %v231
    %v233 = vld [vmem:[%s5] sm:$0xff]
    %v234 = vld [vmem:[%s5 + $0x8] sm:$0xff]
    %v235 = vld [vmem:[%s5 + $0x10] sm:$0xff]
    %v236 = vld [vmem:[%s5 + $0x18] sm:$0xff]
    %v237 = vld [vmem:[%s6] sm:$0x1]
    %v239 = vlaneseq
    %v240 = vshrl.u32 %v239, 7
    %v241 = vsub.s32 0, %v240
    %v242 = vrot.slane %v237, %v241
    %v245 = vsel %vm137, %v232, 0
    %247 = vmatprep.subr.mxu0 0.0
    %248 = vmatpush1.msra.mxu0 %v233
    %249 = vmatprep.subr.mxu0 0.0
    %250 = vmatpush1.msra.mxu0 %v234
    %251 = vmatprep.subr.mxu0 0.0
    %252 = vmatpush1.msra.mxu0 %v235
    %253 = vmatprep.subr.mxu0 0.0
    %254 = vmatpush1.msra.mxu0 %v236
    %255 = vmatprep.subr.mxu0 0.0
    %256 = vmatpush1.msra.mxu0 0.0
    %257 = vmatprep.subr.mxu0 0.0
    %258 = vmatpush1.msra.mxu0 0.0
    %259 = vmatprep.subr.mxu0 0.0
    %260 = vmatpush1.msra.mxu0 0.0
    %261 = vmatprep.subr.mxu0 0.0
    %262 = vmatpush1.msra.mxu0 0.0
    %263 = vmatprep.subr.mxu0 0.0
    %264 = vmatpush1.msra.mxu0 0.0
    %265 = vmatprep.subr.mxu0 0.0
    %266 = vmatpush1.msra.mxu0 0.0
    %267 = vmatprep.subr.mxu0 0.0
    %268 = vmatpush1.msra.mxu0 0.0
    %269 = vmatprep.subr.mxu0 0.0
    %270 = vmatpush1.msra.mxu0 0.0
    %271 = vmatprep.subr.mxu0 0.0
    %272 = vmatpush1.msra.mxu0 0.0
    %273 = vmatprep.subr.mxu0 0.0
    %274 = vmatpush1.msra.mxu0 0.0
    %275 = vmatprep.subr.mxu0 0.0
    %276 = vmatpush1.msra.mxu0 0.0
    %277 = vmatprep.subr.mxu0 0.0
    %278 = vmatpush1.msra.mxu0 0.0
    %279 = vmatprep.subr.mxu0 0.0
    %280 = vmatpush1.msra.mxu0 0.0
    %281 = vmatprep.subr.mxu0 0.0
    %282 = vmatpush1.msra.mxu0 0.0
    %283 = vmatprep.subr.mxu0 0.0
    %284 = vmatpush1.msra.mxu0 0.0
    %285 = vmatprep.subr.mxu0 0.0
    %286 = vmatpush1.msra.mxu0 0.0
    %287 = vmatprep.subr.mxu0 0.0
    %288 = vmatpush1.msra.mxu0 0.0
    %289 = vmatprep.subr.mxu0 0.0
    %290 = vmatpush1.msra.mxu0 0.0
    %291 = vmatprep.subr.mxu0 0.0
    %292 = vmatpush1.msra.mxu0 0.0
    %293 = vmatprep.subr.mxu0 0.0
    %294 = vmatpush1.msra.mxu0 0.0
    %295 = vmatprep.subr.mxu0 0.0
    %296 = vmatpush1.msra.mxu0 0.0
    %297 = vmatprep.subr.mxu0 0.0
    %298 = vmatpush1.msra.mxu0 0.0
    %299 = vmatprep.subr.mxu0 0.0
    %300 = vmatpush1.msra.mxu0 0.0
    %301 = vmatprep.subr.mxu0 0.0
    %302 = vmatpush1.msra.mxu0 0.0
    %303 = vmatprep.subr.mxu0 0.0
    %304 = vmatpush1.msra.mxu0 0.0
    %305 = vmatprep.subr.mxu0 0.0
    %306 = vmatpush1.msra.mxu0 0.0
    %307 = vmatprep.subr.mxu0 0.0
    %308 = vmatpush1.msra.mxu0 0.0
    %309 = vmatprep.subr.mxu0 0.0
    %310 = vmatpush1.msra.mxu0 0.0
    %311 = vmatprep.mubr.f32.mxu0 0.0
    %312 = vmatmul.mubr.f32.gmra.mrb[0].mxu0 %v245
    %v313 = vpop.f32.mrb[0].mxu0
    %v314 = vadd.f32 %v242, %v313
    %v315 = vpop.f32.mrb[0].mxu0
    %316 = vdwg.mxu0
    %vm317 = vcmask 31744
    %318 = vst.msk [vmem:[%s7] sm:$0xff] %vm317, %v314
    // Predicated region
    $region34: #{tpu_custom_call.1} parent=1 // pred_check
      _
    $region35: #{tpu_custom_call.1} parent=1 // pred_check_branch
      %320 = sbr.rel (0) target = $region37
    $region36: #{tpu_custom_call.1} parent=1 // pred_region
      _
    $region37: #{tpu_custom_call.1} parent=1 // pred_fallthru
      _
    // Predicated region
    $region38: #{tpu_custom_call.1} parent=1 // pred_check
      _
    $region39: #{tpu_custom_call.1} parent=1 // pred_check_branch
      %322 = sbr.rel (0) target = $region41
    $region40: #{tpu_custom_call.1} parent=1 // pred_region
      _
    $region41: #{tpu_custom_call.1} parent=1 // pred_fallthru
      _
    %323 = vsyncpa [#allocation3], 1

</llo_original>
